<compile_context>
chip_gen: v7x
topology: tpu7x:2x2x1
jax: 0.10.0
libtpu: 0.0.40
codegen_flags: <defaults>
</compile_context>

<pallas_src>
import jax
import jax.numpy as jnp
from jax import lax
from jax.experimental import pallas as pl
from jax.experimental.pallas import tpu as pltpu


def _round_up(x, m):
    return (x + m - 1) // m * m


def _vmem_plan():
    """Returns (vmem_limit_bytes, emb-stream byte budget) per TPU generation."""
    cap = 64 << 20                                    # conservative default (v7x)
    try:
        info = pltpu.get_tpu_info()
        cap = int(getattr(info, "vmem_capacity_bytes", cap))
    except Exception:
        pass
    if cap <= (64 << 20):                             # v7x-class: 64 MiB physical VMEM
        return 48 << 20, 20 << 20
    return 96 << 20, 48 << 20                         # v5e / v6e: 128 MiB physical VMEM


def _make_head_kernel(H, G, TSC, n_chunks):
    """Fused (masked-)sum pooler + classifier head, gridded over (B tiles, seq tiles).

    emb_ref   : [TB, TSP, LW] bf16  token-embedding tile, G tokens packed per 128 lanes
                (mask already folded in: masked/padded tokens gathered the zero row)
    extra_ref : [TB, H]  f32        analytically folded token-type contribution
    denom_ref : [TB, 1]  f32        precomputed valid-token counts (clamped >= 1)
    wp/bp     : [H, H] bf16, [1, H] f32       pooler dense
    w1/b1     : [H, Hh] bf16, [1, Hh] f32     fc1
    w2/b2     : [Hh, Tp] bf16, [1, Tp] f32    mlp (output layer, lane-padded)
    out_ref   : [TB, Tp] f32        logits (written on last seq step only)
    acc_ref   : [TB, LW] f32        running packed sum accumulator (scratch)
    """

    def kernel(emb_ref, extra_ref, denom_ref,
               wp_ref, bp_ref, w1_ref, b1_ref, w2_ref, b2_ref,
               out_ref, acc_ref):
        s = pl.program_id(1)

        @pl.when(s == 0)
        def _init():
            acc_ref[...] = jnp.zeros_like(acc_ref)

        # Chunked accumulation over the packed sequence-group dim: keeps the live
        # vreg set bounded instead of materializing the whole (possibly multi-MiB)
        # tile for one monolithic reduce.  Plain VPU sum (mask folded into gather).
        def _accum_chunk(off):
            e = emb_ref[:, pl.ds(off, TSC), :].astype(jnp.float32)   # [TB,TSC,LW]
            acc_ref[...] += jnp.sum(e, axis=1)                       # [TB,LW]

        if n_chunks <= 8:
            # short fixed trip count: fully unrolled at trace time
            for c in range(n_chunks):
                _accum_chunk(c * TSC)
        else:
            def body(c, carry):
                _accum_chunk(pl.multiple_of(c * TSC, TSC))
                return carry
            lax.fori_loop(0, n_chunks, body, 0)

        @pl.when(s == pl.num_programs(1) - 1)
        def _finalize():
            # Fold the G token-groups packed into the lane dim back to width H.
            pooled_sum = acc_ref[:, 0:H]
            for g in range(1, G):
                pooled_sum = pooled_sum + acc_ref[:, g * H:(g + 1) * H]

            # Add folded token-type contribution; exact divide by valid-token count.
            pooled = (pooled_sum + extra_ref[...]) / denom_ref[...]          # [TB,H]

            # BERT-style pooler stand-in: dense + tanh ("pooler_output").
            pooler = jnp.tanh(
                jnp.dot(pooled.astype(wp_ref.dtype), wp_ref[...],
                        preferred_element_type=jnp.float32) + bp_ref[...])

            # fc1 + ReLU
            h = jnp.dot(pooler.astype(w1_ref.dtype), w1_ref[...],
                        preferred_element_type=jnp.float32) + b1_ref[...]
            h = jnp.maximum(h, 0.0)

            # bert_drop: dropout is identity at inference time.
            # TODO(synk): training-mode dropout (pltpu.prng_*) not implemented.

            # mlp output projection (lane-padded to Tp)
            out = jnp.dot(h.astype(w2_ref.dtype), w2_ref[...],
                          preferred_element_type=jnp.float32) + b2_ref[...]
            out_ref[...] = out.astype(out_ref.dtype)

    return kernel


def bert_classifier_forward(ids, mask, token_type_ids, params):
    """Mirrors BertClassifier.forward semantics (eval mode)."""
    # .squeeze() as in the PyTorch forward
    ids_sq = jnp.squeeze(ids, axis=1)                                 # [B, S]
    mask_sq = jnp.squeeze(mask, axis=1)                               # [B, S]
    if token_type_ids is not None:
        tt_sq = jnp.squeeze(token_type_ids, axis=1)                   # [B, S]
    else:
        tt_sq = jnp.zeros_like(ids_sq)

    tok_emb = params["tok_emb"]                      # [V+1, H] bf16, row V is all-zero
    type_emb = params["type_emb"]                    # [n_types, H]
    zero_row = tok_emb.shape[0] - 1
    B, S = ids_sq.shape
    H = tok_emb.shape[1]
    Hh = params["w1"].shape[1]
    T = params["w2"].shape[1]
    n_types = type_emb.shape[0]

    # ---- fold mask + token-type embedding analytically (no extra [B,S,H] passes) ---
    mask_f = mask_sq.astype(jnp.float32)
    denom = jnp.maximum(jnp.sum(mask_f, axis=1, keepdims=True), 1.0)          # [B,1]
    type_counts = jnp.einsum("bs,bst->bt", mask_f,
                             jax.nn.one_hot(tt_sq, n_types, dtype=jnp.float32))
    extra = type_counts @ type_emb.astype(jnp.float32)                        # [B,H]
    # masked-out positions gather the all-zero row -> plain sum == masked sum
    ids_eff = jnp.where(mask_sq > 0, ids_sq, zero_row)

    # ---- generation-aware tiling (lane-padding-aware VMEM budget) ------------------
    vmem_limit, tile_budget = _vmem_plan()

    G = max(1, 128 // H)                      # tokens packed into the 128-lane dim
    LW = G * H                                # packed lane width of the emb stream
    LWp = _round_up(LW, 128)                  # lane-PADDED width for the VMEM budget

    B_pad0 = _round_up(B, 8)
    TB = min(B_pad0, 128)                     # large batch tiles -> MiB-scale DMA steps
    if B_pad0 // TB < 2 and B_pad0 >= 16:     # keep parallel axis >= 2 (v7x has 2 TCs)
        TB = _round_up(B_pad0 // 2, 8)
    B_pad = _round_up(B_pad0, TB)

    SP_req = (S + G - 1) // G                 # packed sequence groups actually needed
    per_group = TB * LWp * 2                  # bf16 bytes per packed group-row slab
    TSC = max(8, min((128 << 10) // per_group, 512) // 8 * 8)   # ~<=128 KiB chunks
    TSC = min(TSC, _round_up(SP_req, 8))
    tsp_cap = max(TSC, (tile_budget // (2 * per_group)) // TSC * TSC)
    TSP = min(tsp_cap, _round_up(SP_req, TSC))                  # seq-tile (groups)
    n_chunks = TSP // TSC
    SP_pad = _round_up(SP_req, TSP)
    S_pad = SP_pad * G
    T_pad = _round_up(T, 128)                 # lane-dense logits

    # ---- pad + pack operands (zero-row gather keeps padded math exact) -------------
    ids_p = jnp.pad(ids_eff, ((0, B_pad - B), (0, S_pad - S)),
                    constant_values=zero_row)
    # TODO(synk): fuse the token-row gather into the kernel (manual per-token DMA from
    # tok_emb in HBM) to remove this [B,S,H] HBM round-trip entirely.
    emb_p = tok_emb[ids_p].reshape(B_pad, SP_pad, LW)            # bf16, free reshape

    extra_p = jnp.pad(extra, ((0, B_pad - B), (0, 0)))
    denom_p = jnp.pad(denom, ((0, B_pad - B), (0, 0)), constant_values=1.0)

    wp = params["wp"].astype(jnp.bfloat16)
    bp = params["bp"].astype(jnp.float32)
    w1 = params["w1"].astype(jnp.bfloat16)
    b1 = params["b1"].astype(jnp.float32)
    w2 = jnp.pad(params["w2"].astype(jnp.bfloat16), ((0, 0), (0, T_pad - T)))
    b2 = jnp.pad(params["b2"].astype(jnp.float32), ((0, 0), (0, T_pad - T)))

    grid = (B_pad // TB, SP_pad // TSP)
    resident = lambda b, s: (0, 0)            # weights/biases stay VMEM-resident
    per_batch = lambda b, s: (b, 0)

    cost = pl.CostEstimate(
        flops=2 * B_pad * S_pad * H + 2 * B_pad * (H * H + H * Hh + Hh * T_pad),
        transcendentals=B_pad * H,
        bytes_accessed=int(emb_p.size * 2 + extra_p.size * 4 + denom_p.size * 4
                           + (wp.size + w1.size + w2.size) * 2
                           + (bp.size + b1.size + b2.size) * 4
                           + B_pad * T_pad * 4),
    )

    kernel = _make_head_kernel(H, G, TSC, n_chunks)

    out_p = pl.pallas_call(
        kernel,
        out_shape=jax.ShapeDtypeStruct((B_pad, T_pad), jnp.float32),
        grid_spec=pltpu.PrefetchScalarGridSpec(
            num_scalar_prefetch=0,
            grid=grid,
            in_specs=[
                pl.BlockSpec((TB, TSP, LW), lambda b, s: (b, s, 0)),  # emb stream
                pl.BlockSpec((TB, H), per_batch),                     # type-emb fold
                pl.BlockSpec((TB, 1), per_batch),                     # valid counts
                # NOTE: constant-index weight specs are double-buffered by default;
                # pipeline_mode=pl.Buffered(1) could return VMEM headroom at real
                # H=768 on v7x (negligible at this H, left at the default here).
                pl.BlockSpec((H, H), resident),                       # wp
                pl.BlockSpec((1, H), resident),                       # bp
                pl.BlockSpec((H, Hh), resident),                      # w1
                pl.BlockSpec((1, Hh), resident),                      # b1
                pl.BlockSpec((Hh, T_pad), resident),                  # w2
                pl.BlockSpec((1, T_pad), resident),                   # b2
            ],
            out_specs=pl.BlockSpec((TB, T_pad), per_batch),
            scratch_shapes=[pltpu.VMEM((TB, LW), jnp.float32)],       # packed-sum acc
        ),
        compiler_params=pltpu.CompilerParams(
            dimension_semantics=("parallel", "arbitrary"),
            vmem_limit_bytes=vmem_limit,
        ),
        cost_estimate=cost,
    )(emb_p, extra_p, denom_p, wp, bp, w1, b1, w2, b2)

    return out_p[:B, :T]


def _reference_forward(ids, mask, token_type_ids, params):
    """Pure-JAX f32 reference with identical semantics (sanity check)."""
    ids_sq = jnp.squeeze(ids, axis=1)
    mask_f = jnp.squeeze(mask, axis=1).astype(jnp.float32)
    tt_sq = jnp.squeeze(token_type_ids, axis=1)
    emb = (params["tok_emb"][ids_sq].astype(jnp.float32)
           + params["type_emb"][tt_sq].astype(jnp.float32))
    summed = jnp.einsum("bs,bsh->bh", mask_f, emb)
    denom = jnp.maximum(jnp.sum(mask_f, axis=1, keepdims=True), 1.0)
    pooled = summed / denom
    pooler = jnp.tanh(pooled @ params["wp"].astype(jnp.float32) + params["bp"])
    h = jnp.maximum(pooler @ params["w1"].astype(jnp.float32) + params["b1"], 0.0)
    return h @ params["w2"].astype(jnp.float32) + params["b2"]


def init_params(key, vocab_size, hidden, mlp_hidden, ntargets):
    ks = jax.random.split(key, 5)
    scale = 0.02
    tok = scale * jax.random.normal(ks[0], (vocab_size, hidden), jnp.float32)
    # Extra all-zero row at index `vocab_size`: masked-out / padded positions gather
    # it, which folds the attention mask into the gather (no in-kernel mask multiply).
    tok = jnp.concatenate([tok, jnp.zeros((1, hidden), jnp.float32)], axis=0)
    return {
        # big tensors stored bf16 (halves HBM traffic), biases f32
        "tok_emb":  tok.astype(jnp.bfloat16),                                  # [V+1,H]
        "type_emb": (scale * jax.random.normal(ks[1], (2, hidden))).astype(jnp.bfloat16),
        "wp": (scale * jax.random.normal(ks[2], (hidden, hidden))).astype(jnp.bfloat16),
        "bp": jnp.zeros((1, hidden), jnp.float32),
        "w1": (scale * jax.random.normal(ks[3], (hidden, mlp_hidden))).astype(jnp.bfloat16),
        "b1": 0.01 * jnp.ones((1, mlp_hidden), jnp.float32),
        "w2": (scale * jax.random.normal(ks[4], (mlp_hidden, ntargets))).astype(jnp.bfloat16),
        "b2": jnp.zeros((1, ntargets), jnp.float32),
    }


if __name__ == "__main__":
    # small shapes consistent with the module:
    #   batch=2, seq=8, bert hidden (input_size)=32, hidden_size=32, ntargets=4
    B, S, V = 2, 8, 64
    INPUT_SIZE, HIDDEN_SIZE, NTARGETS = 32, 32, 4

    key = jax.random.PRNGKey(0)
    k_ids, k_params = jax.random.split(key)

    params = init_params(k_params, V, INPUT_SIZE, HIDDEN_SIZE, NTARGETS)

    ids = jax.random.randint(k_ids, (B, 1, S), 0, V, dtype=jnp.int32)
    # attention mask: first 6 positions valid, last 2 padded
    mask = jnp.concatenate(
        [jnp.ones((B, 1, 6), jnp.int32), jnp.zeros((B, 1, 2), jnp.int32)], axis=-1)
    token_type_ids = jnp.zeros((B, 1, S), jnp.int32)

    fwd = jax.jit(bert_classifier_forward)
    logits = jax.block_until_ready(fwd(ids, mask, token_type_ids, params))

    assert logits.shape == (B, NTARGETS), logits.shape
    assert bool(jnp.all(jnp.isfinite(logits)))

    ref = _reference_forward(ids, mask, token_type_ids, params)
    assert jnp.allclose(logits, ref, rtol=5e-2, atol=2e-3), (logits, ref)

    print("KERNEL_OK")
</pallas_src>

<mosaic_0001>
module attributes {stable_mosaic.version = 11 : i64} {
  func.func @kernel(%arg0: i32, %arg1: i32, %arg2: memref<8x8x128xbf16, #tpu.memory_space<vmem>>, %arg3: memref<8x32xf32, #tpu.memory_space<vmem>>, %arg4: memref<8x1xf32, #tpu.memory_space<vmem>>, %arg5: memref<32x32xbf16, #tpu.memory_space<vmem>>, %arg6: memref<1x32xf32, #tpu.memory_space<vmem>>, %arg7: memref<32x32xbf16, #tpu.memory_space<vmem>>, %arg8: memref<1x32xf32, #tpu.memory_space<vmem>>, %arg9: memref<32x128xbf16, #tpu.memory_space<vmem>>, %arg10: memref<1x128xf32, #tpu.memory_space<vmem>>, %arg11: memref<8x128xf32, #tpu.memory_space<vmem>>, %arg12: memref<8x128xf32, #tpu.memory_space<vmem>>) attributes {dimension_semantics = [#tpu.dimension_semantics<parallel>, #tpu.dimension_semantics<arbitrary>], iteration_bounds = array<i64: 1, 1>, scalar_prefetch = 0 : i64, scratch_operands = 1 : i64, tpu.core_type = #tpu.core_type<tc>, window_params = [{transform_indices = @transform_0, window_bounds = array<i64: 8, 8, 128>}, {transform_indices = @transform_1, window_bounds = array<i64: 8, 32>}, {transform_indices = @transform_2, window_bounds = array<i64: 8, 1>}, {pipeline_mode = #tpu.pipeline_mode<synchronous>, transform_indices = @transform_3, window_bounds = array<i64: 32, 32>}, {pipeline_mode = #tpu.pipeline_mode<synchronous>, transform_indices = @transform_4, window_bounds = array<i64: 1, 32>}, {pipeline_mode = #tpu.pipeline_mode<synchronous>, transform_indices = @transform_5, window_bounds = array<i64: 32, 32>}, {pipeline_mode = #tpu.pipeline_mode<synchronous>, transform_indices = @transform_6, window_bounds = array<i64: 1, 32>}, {pipeline_mode = #tpu.pipeline_mode<synchronous>, transform_indices = @transform_7, window_bounds = array<i64: 32, 128>}, {pipeline_mode = #tpu.pipeline_mode<synchronous>, transform_indices = @transform_8, window_bounds = array<i64: 1, 128>}, {transform_indices = @transform_9, window_bounds = array<i64: 8, 128>}]} {
    %c0_i32 = arith.constant 0 : i32
    %0 = arith.cmpi eq, %arg1, %c0_i32 : i32
    %1 = arith.extui %0 : i1 to i32
    %c0_i32_0 = arith.constant 0 : i32
    %2 = arith.cmpi ne, %1, %c0_i32_0 : i32
    scf.if %2 {
      %cst_9 = arith.constant 0.000000e+00 : f32
      %12 = vector.broadcast %cst_9 : f32 to vector<8x128xf32>
      %c0_10 = arith.constant 0 : index
      %c0_11 = arith.constant 0 : index
      %13 = vector.load %arg12[%c0_10, %c0_11] : memref<8x128xf32, #tpu.memory_space<vmem>>, vector<8x128xf32>
      tpu.vector_store %arg12[%c0_10, %c0_11], %12 {strides = array<i32>} : memref<8x128xf32, #tpu.memory_space<vmem>>, vector<8x128xf32>,
    } else {
    }
    %c0 = arith.constant 0 : index
    %c0_1 = arith.constant 0 : index
    %c0_2 = arith.constant 0 : index
    %3 = vector.load %arg2[%c0, %c0_1, %c0_2] : memref<8x8x128xbf16, #tpu.memory_space<vmem>>, vector<8x8x128xbf16>
    %4 = arith.extf %3 : vector<8x8x128xbf16> to vector<8x8x128xf32>
    %c0_3 = arith.constant 0 : index
    %c0_4 = arith.constant 0 : index
    %5 = vector.load %arg12[%c0_3, %c0_4] : memref<8x128xf32, #tpu.memory_space<vmem>>, vector<8x128xf32>
    %cst = arith.constant dense<0.000000e+00> : vector<8x128xf32>
    %6 = vector.multi_reduction <add>, %4, %cst [1] : vector<8x8x128xf32> to vector<8x128xf32>
    %7 = arith.addf %5, %6 : vector<8x128xf32>
    %c0_5 = arith.constant 0 : index
    %c0_6 = arith.constant 0 : index
    %8 = vector.load %arg12[%c0_5, %c0_6] : memref<8x128xf32, #tpu.memory_space<vmem>>, vector<8x128xf32>
    tpu.vector_store %arg12[%c0_5, %c0_6], %7 {strides = array<i32>} : memref<8x128xf32, #tpu.memory_space<vmem>>, vector<8x128xf32>,
    %c0_i32_7 = arith.constant 0 : i32
    %9 = arith.cmpi eq, %arg1, %c0_i32_7 : i32
    %10 = arith.extui %9 : i1 to i32
    %c0_i32_8 = arith.constant 0 : i32
    %11 = arith.cmpi ne, %10, %c0_i32_8 : i32
    scf.if %11 {
      %c0_9 = arith.constant 0 : index
      %c0_10 = arith.constant 0 : index
      %12 = vector.load %arg12[%c0_9, %c0_10] : memref<8x128xf32, #tpu.memory_space<vmem>>, vector<8x32xf32>
      %c0_11 = arith.constant 0 : index
      %c32 = arith.constant 32 : index
      %13 = vector.load %arg12[%c0_11, %c32] : memref<8x128xf32, #tpu.memory_space<vmem>>, vector<8x32xf32>
      %14 = arith.addf %12, %13 : vector<8x32xf32>
      %c0_12 = arith.constant 0 : index
      %c64 = arith.constant 64 : index
      %15 = vector.load %arg12[%c0_12, %c64] : memref<8x128xf32, #tpu.memory_space<vmem>>, vector<8x32xf32>
      %16 = arith.addf %14, %15 : vector<8x32xf32>
      %c0_13 = arith.constant 0 : index
      %c96 = arith.constant 96 : index
      %17 = vector.load %arg12[%c0_13, %c96] : memref<8x128xf32, #tpu.memory_space<vmem>>, vector<8x32xf32>
      %18 = arith.addf %16, %17 : vector<8x32xf32>
      %c0_14 = arith.constant 0 : index
      %c0_15 = arith.constant 0 : index
      %19 = vector.load %arg3[%c0_14, %c0_15] : memref<8x32xf32, #tpu.memory_space<vmem>>, vector<8x32xf32>
      %20 = arith.addf %18, %19 : vector<8x32xf32>
      %c0_16 = arith.constant 0 : index
      %c0_17 = arith.constant 0 : index
      %21 = vector.load %arg4[%c0_16, %c0_17] : memref<8x1xf32, #tpu.memory_space<vmem>>, vector<8x1xf32>
      %22 = vector.broadcast %21 : vector<8x1xf32> to vector<8x32xf32>
      %23 = arith.divf %20, %22 : vector<8x32xf32>
      %24 = arith.truncf %23 : vector<8x32xf32> to vector<8x32xbf16>
      %c0_18 = arith.constant 0 : index
      %c0_19 = arith.constant 0 : index
      %25 = vector.load %arg5[%c0_18, %c0_19] : memref<32x32xbf16, #tpu.memory_space<vmem>>, vector<32x32xbf16>
      %cst_20 = arith.constant dense<0.000000e+00> : vector<8x32xf32>
      %26 = tpu.matmul %24, %25, %cst_20 {dimension_numbers = #tpu.dot_dimension_numbers<[1], [0], [0], [1], [0, 0, 1, 1], [], []>} : vector<8x32xbf16>, vector<32x32xbf16>, vector<8x32xf32> -> vector<8x32xf32>
      %c0_21 = arith.constant 0 : index
      %c0_22 = arith.constant 0 : index
      %27 = vector.load %arg6[%c0_21, %c0_22] : memref<1x32xf32, #tpu.memory_space<vmem>>, vector<1x32xf32>
      %28 = vector.broadcast %27 : vector<1x32xf32> to vector<8x32xf32>
      %29 = arith.addf %26, %28 : vector<8x32xf32>
      %30 = math.tanh %29 : vector<8x32xf32>
      %31 = arith.truncf %30 : vector<8x32xf32> to vector<8x32xbf16>
      %c0_23 = arith.constant 0 : index
      %c0_24 = arith.constant 0 : index
      %32 = vector.load %arg7[%c0_23, %c0_24] : memref<32x32xbf16, #tpu.memory_space<vmem>>, vector<32x32xbf16>
      %cst_25 = arith.constant dense<0.000000e+00> : vector<8x32xf32>
      %33 = tpu.matmul %31, %32, %cst_25 {dimension_numbers = #tpu.dot_dimension_numbers<[1], [0], [0], [1], [0, 0, 1, 1], [], []>} : vector<8x32xbf16>, vector<32x32xbf16>, vector<8x32xf32> -> vector<8x32xf32>
      %c0_26 = arith.constant 0 : index
      %c0_27 = arith.constant 0 : index
      %34 = vector.load %arg8[%c0_26, %c0_27] : memref<1x32xf32, #tpu.memory_space<vmem>>, vector<1x32xf32>
      %35 = vector.broadcast %34 : vector<1x32xf32> to vector<8x32xf32>
      %36 = arith.addf %33, %35 : vector<8x32xf32>
      %cst_28 = arith.constant 0.000000e+00 : f32
      %37 = vector.broadcast %cst_28 : f32 to vector<8x32xf32>
      %38 = arith.maximumf %36, %37 : vector<8x32xf32>
      %39 = arith.truncf %38 : vector<8x32xf32> to vector<8x32xbf16>
      %c0_29 = arith.constant 0 : index
      %c0_30 = arith.constant 0 : index
      %40 = vector.load %arg9[%c0_29, %c0_30] : memref<32x128xbf16, #tpu.memory_space<vmem>>, vector<32x128xbf16>
      %cst_31 = arith.constant dense<0.000000e+00> : vector<8x128xf32>
      %41 = tpu.matmul %39, %40, %cst_31 {dimension_numbers = #tpu.dot_dimension_numbers<[1], [0], [0], [1], [0, 0, 1, 1], [], []>} : vector<8x32xbf16>, vector<32x128xbf16>, vector<8x128xf32> -> vector<8x128xf32>
      %c0_32 = arith.constant 0 : index
      %c0_33 = arith.constant 0 : index
      %42 = vector.load %arg10[%c0_32, %c0_33] : memref<1x128xf32, #tpu.memory_space<vmem>>, vector<1x128xf32>
      %43 = vector.broadcast %42 : vector<1x128xf32> to vector<8x128xf32>
      %44 = arith.addf %41, %43 : vector<8x128xf32>
      %c0_34 = arith.constant 0 : index
      %c0_35 = arith.constant 0 : index
      %45 = vector.load %arg11[%c0_34, %c0_35] : memref<8x128xf32, #tpu.memory_space<vmem>>, vector<8x128xf32>
      tpu.vector_store %arg11[%c0_34, %c0_35], %44 {strides = array<i32>} : memref<8x128xf32, #tpu.memory_space<vmem>>, vector<8x128xf32>,
    } else {
    }
    return
  }
  func.func @transform_0(%arg0: i32, %arg1: i32) -> (i32, i32, i32) {
    %c0_i32 = arith.constant 0 : i32
    %c0_i32_0 = arith.constant 0 : i32
    return %arg0, %arg1, %c0_i32 : i32, i32, i32
  }
  func.func @transform_1(%arg0: i32, %arg1: i32) -> (i32, i32) {
    %c0_i32 = arith.constant 0 : i32
    %c0_i32_0 = arith.constant 0 : i32
    return %arg0, %c0_i32 : i32, i32
  }
  func.func @transform_2(%arg0: i32, %arg1: i32) -> (i32, i32) {
    %c0_i32 = arith.constant 0 : i32
    %c0_i32_0 = arith.constant 0 : i32
    return %arg0, %c0_i32 : i32, i32
  }
  func.func @transform_3(%arg0: i32, %arg1: i32) -> (i32, i32) {
    %c0_i32 = arith.constant 0 : i32
    %c0_i32_0 = arith.constant 0 : i32
    %c0_i32_1 = arith.constant 0 : i32
    return %c0_i32, %c0_i32_0 : i32, i32
  }
  func.func @transform_4(%arg0: i32, %arg1: i32) -> (i32, i32) {
    %c0_i32 = arith.constant 0 : i32
    %c0_i32_0 = arith.constant 0 : i32
    %c0_i32_1 = arith.constant 0 : i32
    return %c0_i32, %c0_i32_0 : i32, i32
  }
  func.func @transform_5(%arg0: i32, %arg1: i32) -> (i32, i32) {
    %c0_i32 = arith.constant 0 : i32
    %c0_i32_0 = arith.constant 0 : i32
    %c0_i32_1 = arith.constant 0 : i32
    return %c0_i32, %c0_i32_0 : i32, i32
  }
  func.func @transform_6(%arg0: i32, %arg1: i32) -> (i32, i32) {
    %c0_i32 = arith.constant 0 : i32
    %c0_i32_0 = arith.constant 0 : i32
    %c0_i32_1 = arith.constant 0 : i32
    return %c0_i32, %c0_i32_0 : i32, i32
  }
  func.func @transform_7(%arg0: i32, %arg1: i32) -> (i32, i32) {
    %c0_i32 = arith.constant 0 : i32
    %c0_i32_0 = arith.constant 0 : i32
    %c0_i32_1 = arith.constant 0 : i32
    return %c0_i32, %c0_i32_0 : i32, i32
  }
  func.func @transform_8(%arg0: i32, %arg1: i32) -> (i32, i32) {
    %c0_i32 = arith.constant 0 : i32
    %c0_i32_0 = arith.constant 0 : i32
    %c0_i32_1 = arith.constant 0 : i32
    return %c0_i32, %c0_i32_0 : i32, i32
  }
  func.func @transform_9(%arg0: i32, %arg1: i32) -> (i32, i32) {
    %c0_i32 = arith.constant 0 : i32
    %c0_i32_0 = arith.constant 0 : i32
    return %arg0, %c0_i32 : i32, i32
  }
}

</mosaic_0001>

<llo_original>
// kernel: bert_classifier_forward.1
$region0: #{bert_classifier_forward.1}
  #allocation0 [shape = 'u32[]', space=smem, size = 0x4, offset = 0x4, fixed_abs, tag = 'smem constant byte address 0x4 - core index']
  #allocation1 [shape = 'u32[144,128]{1,0:T(1,128)}', space=vmem, size = 0x12000, scoped, tag = 'internal scratch']
  #allocation2 [shape = 'f32[8,128]{1,0:T(8,128)}', space=vmem, size = 0x1000, scoped, tag = 'scratch operand']
  %s0 = inlined_call_operand.vmem [shape: bf16[8,8,128], index: 0, kind: input, shape index: {}]
  %s1 = inlined_call_operand.vmem [shape: f32[8,32], index: 1, kind: input, shape index: {}]
  %s2 = inlined_call_operand.vmem [shape: f32[8,1], index: 2, kind: input, shape index: {}]
  %s3 = inlined_call_operand.vmem [shape: bf16[32,32], index: 3, kind: input, shape index: {}]
  %s4 = inlined_call_operand.vmem [shape: f32[1,32], index: 4, kind: input, shape index: {}]
  %s5 = inlined_call_operand.vmem [shape: bf16[32,32], index: 5, kind: input, shape index: {}]
  %s6 = inlined_call_operand.vmem [shape: f32[1,32], index: 6, kind: input, shape index: {}]
  %s7 = inlined_call_operand.vmem [shape: bf16[32,128], index: 7, kind: input, shape index: {}]
  %s8 = inlined_call_operand.vmem [shape: f32[1,128], index: 8, kind: input, shape index: {}]
  %s9 = inlined_call_operand.vmem [shape: f32[8,128], index: 9, kind: output, shape index: {}]
  %s10 = sld [smem:[#allocation0]]
  $region54: #{bert_classifier_forward.1} parent=0
    _
  %s12 = ssub.s32 1, %s10
  %s13 = scalar_select 0, %s12, %s10
  // Predicated region
  $region2: #{bert_classifier_forward.1} parent=0 // pred_check
    _
  $region3: #{bert_classifier_forward.1} parent=0 // pred_check_branch
    %15 = sbr.rel (0) target = $region5
  $region4: #{bert_classifier_forward.1} parent=0 // pred_region
    _
  $region5: #{bert_classifier_forward.1} parent=0 // pred_fallthru
    _
  // Predicated region
  $region6: #{bert_classifier_forward.1} parent=0 // pred_check
    _
  $region7: #{bert_classifier_forward.1} parent=0 // pred_check_branch
    %17 = sbr.rel (0) target = $region9
  $region8: #{bert_classifier_forward.1} parent=0 // pred_region
    _
  $region9: #{bert_classifier_forward.1} parent=0 // pred_fallthru
    _
  // Predicated region
  $region10: #{bert_classifier_forward.1} parent=0 // pred_check
    _
  $region11: #{bert_classifier_forward.1} parent=0 // pred_check_branch
    %19 = sbr.rel (0) target = $region13
  $region12: #{bert_classifier_forward.1} parent=0 // pred_region
    _
  $region13: #{bert_classifier_forward.1} parent=0 // pred_fallthru
    _
  // Predicated region
  $region14: #{bert_classifier_forward.1} parent=0 // pred_check
    _
  $region15: #{bert_classifier_forward.1} parent=0 // pred_check_branch
    %21 = sbr.rel (0) target = $region17
  $region16: #{bert_classifier_forward.1} parent=0 // pred_region
    _
  $region17: #{bert_classifier_forward.1} parent=0 // pred_fallthru
    _
  // Predicated region
  $region18: #{bert_classifier_forward.1} parent=0 // pred_check
    _
  $region19: #{bert_classifier_forward.1} parent=0 // pred_check_branch
    %23 = sbr.rel (0) target = $region21
  $region20: #{bert_classifier_forward.1} parent=0 // pred_region
    _
  $region21: #{bert_classifier_forward.1} parent=0 // pred_fallthru
    _
  // Predicated region
  $region22: #{bert_classifier_forward.1} parent=0 // pred_check
    _
  $region23: #{bert_classifier_forward.1} parent=0 // pred_check_branch
    %25 = sbr.rel (0) target = $region25
  $region24: #{bert_classifier_forward.1} parent=0 // pred_region
    _
  $region25: #{bert_classifier_forward.1} parent=0 // pred_fallthru
    _
  // Predicated region
  $region26: #{bert_classifier_forward.1} parent=0 // pred_check
    _
  $region27: #{bert_classifier_forward.1} parent=0 // pred_check_branch
    %27 = sbr.rel (0) target = $region29
  $region28: #{bert_classifier_forward.1} parent=0 // pred_region
    _
  $region29: #{bert_classifier_forward.1} parent=0 // pred_fallthru
    _
  // Predicated region
  $region30: #{bert_classifier_forward.1} parent=0 // pred_check
    _
  $region31: #{bert_classifier_forward.1} parent=0 // pred_check_branch
    %29 = sbr.rel (0) target = $region33
  $region32: #{bert_classifier_forward.1} parent=0 // pred_region
    _
  $region33: #{bert_classifier_forward.1} parent=0 // pred_fallthru
    _
  // Predicated region
  $region34: #{bert_classifier_forward.1} parent=0 // pred_check
    _
  $region35: #{bert_classifier_forward.1} parent=0 // pred_check_branch
    %31 = sbr.rel (0) target = $region37
  $region36: #{bert_classifier_forward.1} parent=0 // pred_region
    _
  $region37: #{bert_classifier_forward.1} parent=0 // pred_fallthru
    _
  %p33 = scmp.eq.s32.totalorder 0, 0
  // Predicated region
  $region38: #{bert_classifier_forward.1} parent=0 // pred_check
    %p34 = pneg %p33
  $region39: #{bert_classifier_forward.1} parent=0 // pred_check_branch
    %36 = sbr.rel (%p34) target = $region41
  $region40: #{bert_classifier_forward.1} parent=0 // pred_region
    %37 = vst [vmem:[#allocation2] sm:$0xff] 0.0
  $region41: #{bert_classifier_forward.1} parent=0 // pred_fallthru
    _
  %v38 = vld [vmem:[%s0] sm:$0xf]
  %v39 = vld [vmem:[%s0 + $0x4] sm:$0xf]
  %v40 = vld [vmem:[%s0 + $0x8] sm:$0xf]
  %v41 = vld [vmem:[%s0 + $0xc] sm:$0xf]
  %v42 = vld [vmem:[%s0 + $0x10] sm:$0xf]
  %v43 = vld [vmem:[%s0 + $0x14] sm:$0xf]
  %v44 = vld [vmem:[%s0 + $0x18] sm:$0xf]
  %v45 = vld [vmem:[%s0 + $0x1c] sm:$0xf]
  %v46 = vunpack.c.l.bf16 %v38
  %v47 = vunpack.c.l.bf16 %v39
  %v48 = vunpack.c.l.bf16 %v40
  %v49 = vunpack.c.l.bf16 %v41
  %v50 = vunpack.c.l.bf16 %v42
  %v51 = vunpack.c.l.bf16 %v43
  %v52 = vunpack.c.l.bf16 %v44
  %v53 = vunpack.c.l.bf16 %v45
  %v54 = vld [vmem:[#allocation2] sm:$0xff]
  %v55 = vrot.slane %v46, 4
  %v56 = vadd.f32 %v46, %v55
  %v57 = vrot.slane %v56, 2
  %v58 = vadd.f32 %v56, %v57
  %v59 = vrot.slane %v58, 1
  %v60 = vadd.f32 %v58, %v59
  %v61 = vrot.slane %v47, 4
  %v62 = vadd.f32 %v47, %v61
  %v63 = vrot.slane %v62, 2
  %v64 = vadd.f32 %v62, %v63
  %v65 = vrot.slane %v64, 1
  %v66 = vadd.f32 %v64, %v65
  %v67 = vrot.slane %v48, 4
  %v68 = vadd.f32 %v48, %v67
  %v69 = vrot.slane %v68, 2
  %v70 = vadd.f32 %v68, %v69
  %v71 = vrot.slane %v70, 1
  %v72 = vadd.f32 %v70, %v71
  %v73 = vrot.slane %v49, 4
  %v74 = vadd.f32 %v49, %v73
  %v75 = vrot.slane %v74, 2
  %v76 = vadd.f32 %v74, %v75
  %v77 = vrot.slane %v76, 1
  %v78 = vadd.f32 %v76, %v77
  %v79 = vrot.slane %v50, 4
  %v80 = vadd.f32 %v50, %v79
  %v81 = vrot.slane %v80, 2
  %v82 = vadd.f32 %v80, %v81
  %v83 = vrot.slane %v82, 1
  %v84 = vadd.f32 %v82, %v83
  %v85 = vrot.slane %v51, 4
  %v86 = vadd.f32 %v51, %v85
  %v87 = vrot.slane %v86, 2
  %v88 = vadd.f32 %v86, %v87
  %v89 = vrot.slane %v88, 1
  %v90 = vadd.f32 %v88, %v89
  %v91 = vrot.slane %v52, 4
  %v92 = vadd.f32 %v52, %v91
  %v93 = vrot.slane %v92, 2
  %v94 = vadd.f32 %v92, %v93
  %v95 = vrot.slane %v94, 1
  %v96 = vadd.f32 %v94, %v95
  %v97 = vrot.slane %v53, 4
  %v98 = vadd.f32 %v53, %v97
  %v99 = vrot.slane %v98, 2
  %v100 = vadd.f32 %v98, %v99
  %v101 = vrot.slane %v100, 1
  %v102 = vadd.f32 %v100, %v101
  %vm111 = vcmask 1041409
  %v112 = vsel %vm111, %v66, %v60
  %vm113 = vcmask 1042434
  %v114 = vsel %vm113, %v72, %v112
  %vm115 = vcmask 1043459
  %v116 = vsel %vm115, %v78, %v114
  %vm117 = vcmask 1044484
  %v118 = vsel %vm117, %v84, %v116
  %vm119 = vcmask 1045509
  %v120 = vsel %vm119, %v90, %v118
  %vm121 = vcmask 1046534
  %v122 = vsel %vm121, %v96, %v120
  %vm123 = vcmask 1047559
  %v124 = vsel %vm123, %v102, %v122
  %v126 = vadd.f32 %v54, %v124
  %127 = vst [vmem:[#allocation2] sm:$0xff] %v126
  // Predicated region
  $region42: #{bert_classifier_forward.1} parent=0 // pred_check
    %p128 = pneg %p33
  $region43: #{bert_classifier_forward.1} parent=0 // pred_check_branch
    %130 = sbr.rel (%p128) target = $region45
  $region44: #{bert_classifier_forward.1} parent=0 // pred_region
    %v131 = vld [vmem:[#allocation2] sm:$0xff]
    %133 = vrot.lane.b32.xlu0 %v131, 96
    %v134 = vpop.permute.xlu0 %133
    %v136 = vadd.f32 %v131, %v134
    %137 = vrot.lane.b32.xlu0 %v131, 64
    %v138 = vpop.permute.xlu0 %137
    %v140 = vadd.f32 %v136, %v138
    %141 = vrot.lane.b32.xlu0 %v131, 32
    %v142 = vpop.permute.xlu0 %141
    %v144 = vadd.f32 %v140, %v142
    %v145 = vld [vmem:[%s1] sm:$0xff]
    %v146 = vadd.f32 %v144, %v145
    %v147 = vld [vmem:[%s2] sm:$0xff]
    %149 = vset.pattern.permute.xlu0 0
    %150 = vperm.xlu0 %149, %v147
    %v151 = vpop.permute.xlu0 %150
    %v153 = vrcp.pop %v151
    %v154 = vmul.f32 %v146, %v153
    %v155 = vpack.c.bf16 %v154, %v154
    %v156 = vld [vmem:[%s3] sm:$0xf]
    %v157 = vld [vmem:[%s3 + $0x4] sm:$0xf]
    %v158 = vld [vmem:[%s3 + $0x8] sm:$0xf]
    %v159 = vld [vmem:[%s3 + $0xc] sm:$0xf]
    %v160 = vld [vmem:[%s4] sm:$0x1]
    %v162 = vlaneseq
    %v163 = vshrl.u32 %v162, 7
    %v164 = vsub.s32 0, %v163
    %v165 = vrot.slane %v160, %v164
    %v171 = vunpack.c.l.b16 %v156
    %v172 = vunpack.c.l.b16 %v157
    %v173 = vunpack.c.l.b16 %v158
    %v174 = vunpack.c.l.b16 %v159
    %v175 = vpack.c.b16 %v172, %v171
    %v176 = vpack.c.b16 %v174, %v173
    %vm179 = vcmask 261120
    %v181 = vsel %vm179, %v155, 0
    %183 = vmatprep.subr.bf16.mxu0 0
    %184 = vmatpush1.bf16.msra.mxu0 %v175
    %185 = vmatprep.subr.bf16.mxu0 0
    %186 = vmatpush1.bf16.msra.mxu0 %v176
    %187 = vmatprep.subr.bf16.mxu0 0
    %188 = vmatpush1.bf16.msra.mxu0 0
    %189 = vmatprep.subr.bf16.mxu0 0
    %190 = vmatpush1.bf16.msra.mxu0 0
    %191 = vmatprep.subr.bf16.mxu0 0
    %192 = vmatpush1.bf16.msra.mxu0 0
    %193 = vmatprep.subr.bf16.mxu0 0
    %194 = vmatpush1.bf16.msra.mxu0 0
    %195 = vmatprep.subr.bf16.mxu0 0
    %196 = vmatpush1.bf16.msra.mxu0 0
    %197 = vmatprep.subr.bf16.mxu0 0
    %198 = vmatpush1.bf16.msra.mxu0 0
    %199 = vmatprep.subr.bf16.mxu0 0
    %200 = vmatpush1.bf16.msra.mxu0 0
    %201 = vmatprep.subr.bf16.mxu0 0
    %202 = vmatpush1.bf16.msra.mxu0 0
    %203 = vmatprep.subr.bf16.mxu0 0
    %204 = vmatpush1.bf16.msra.mxu0 0
    %205 = vmatprep.subr.bf16.mxu0 0
    %206 = vmatpush1.bf16.msra.mxu0 0
    %207 = vmatprep.subr.bf16.mxu0 0
    %208 = vmatpush1.bf16.msra.mxu0 0
    %209 = vmatprep.subr.bf16.mxu0 0
    %210 = vmatpush1.bf16.msra.mxu0 0
    %211 = vmatprep.subr.bf16.mxu0 0
    %212 = vmatpush1.bf16.msra.mxu0 0
    %213 = vmatprep.subr.bf16.mxu0 0
    %214 = vmatpush1.bf16.msra.mxu0 0
    %215 = vmatprep.mubr.bf16.mxu0 0
    %216 = vmatmul.mubr.bf16.gmra.mrb[0].mxu0 %v181
    %v217 = vpop.f32.mrb[0].mxu0
    %v218 = vadd.f32 %v165, %v217
    %v219 = vpop.f32.mrb[0].mxu0
    %v220 = vpop.f32.mrb[0].mxu0
    %v221 = vpop.f32.mrb[0].mxu0
    %222 = vdwg.mxu0
    %v223 = vtanh.pop %v218
    %v224 = vpack.c.bf16 %v223, %v223
    %v225 = vld [vmem:[%s5] sm:$0xf]
    %v226 = vld [vmem:[%s5 + $0x4] sm:$0xf]
    %v227 = vld [vmem:[%s5 + $0x8] sm:$0xf]
    %v228 = vld [vmem:[%s5 + $0xc] sm:$0xf]
    %v229 = vld [vmem:[%s6] sm:$0x1]
    %v231 = vlaneseq
    %v232 = vshrl.u32 %v231, 7
    %v233 = vsub.s32 0, %v232
    %v234 = vrot.slane %v229, %v233
    %v240 = vunpack.c.l.b16 %v225
    %v241 = vunpack.c.l.b16 %v226
    %v242 = vunpack.c.l.b16 %v227
    %v243 = vunpack.c.l.b16 %v228
    %v244 = vpack.c.b16 %v241, %v240
    %v245 = vpack.c.b16 %v243, %v242
    %v249 = vsel %vm179, %v224, 0
    %251 = vmatprep.subr.bf16.mxu0 0
    %252 = vmatpush1.bf16.msra.mxu0 %v244
    %253 = vmatprep.subr.bf16.mxu0 0
    %254 = vmatpush1.bf16.msra.mxu0 %v245
    %255 = vmatprep.subr.bf16.mxu0 0
    %256 = vmatpush1.bf16.msra.mxu0 0
    %257 = vmatprep.subr.bf16.mxu0 0
    %258 = vmatpush1.bf16.msra.mxu0 0
    %259 = vmatprep.subr.bf16.mxu0 0
    %260 = vmatpush1.bf16.msra.mxu0 0
    %261 = vmatprep.subr.bf16.mxu0 0
    %262 = vmatpush1.bf16.msra.mxu0 0
    %263 = vmatprep.subr.bf16.mxu0 0
    %264 = vmatpush1.bf16.msra.mxu0 0
    %265 = vmatprep.subr.bf16.mxu0 0
    %266 = vmatpush1.bf16.msra.mxu0 0
    %267 = vmatprep.subr.bf16.mxu0 0
    %268 = vmatpush1.bf16.msra.mxu0 0
    %269 = vmatprep.subr.bf16.mxu0 0
    %270 = vmatpush1.bf16.msra.mxu0 0
    %271 = vmatprep.subr.bf16.mxu0 0
    %272 = vmatpush1.bf16.msra.mxu0 0
    %273 = vmatprep.subr.bf16.mxu0 0
    %274 = vmatpush1.bf16.msra.mxu0 0
    %275 = vmatprep.subr.bf16.mxu0 0
    %276 = vmatpush1.bf16.msra.mxu0 0
    %277 = vmatprep.subr.bf16.mxu0 0
    %278 = vmatpush1.bf16.msra.mxu0 0
    %279 = vmatprep.subr.bf16.mxu0 0
    %280 = vmatpush1.bf16.msra.mxu0 0
    %281 = vmatprep.subr.bf16.mxu0 0
    %282 = vmatpush1.bf16.msra.mxu0 0
    %283 = vmatprep.mubr.bf16.mxu0 0
    %284 = vmatmul.mubr.bf16.gmra.mrb[0].mxu0 %v249
    %v285 = vpop.f32.mrb[0].mxu0
    %v286 = vadd.f32 %v234, %v285
    %v287 = vpop.f32.mrb[0].mxu0
    %v288 = vpop.f32.mrb[0].mxu0
    %v289 = vpop.f32.mrb[0].mxu0
    %290 = vdwg.mxu0
    %v291 = vmax.f32 %v286, 0.0
    %v292 = vpack.c.bf16 %v291, %v291
    %v293 = vld [vmem:[%s7] sm:$0xf]
    %v294 = vld [vmem:[%s7 + $0x4] sm:$0xf]
    %v295 = vld [vmem:[%s7 + $0x8] sm:$0xf]
    %v296 = vld [vmem:[%s7 + $0xc] sm:$0xf]
    %v297 = vld [vmem:[%s8] sm:$0x1]
    %v299 = vlaneseq
    %v300 = vshrl.u32 %v299, 7
    %v301 = vsub.s32 0, %v300
    %v302 = vrot.slane %v297, %v301
    %v308 = vunpack.c.l.b16 %v293
    %v309 = vunpack.c.l.b16 %v294
    %v310 = vunpack.c.l.b16 %v295
    %v311 = vunpack.c.l.b16 %v296
    %v312 = vpack.c.b16 %v309, %v308
    %v313 = vpack.c.b16 %v311, %v310
    %v317 = vsel %vm179, %v292, 0
    %319 = vmatprep.subr.bf16.mxu0 0
    %320 = vmatpush1.bf16.msra.mxu0 %v312
    %321 = vmatprep.subr.bf16.mxu0 0
    %322 = vmatpush1.bf16.msra.mxu0 %v313
    %323 = vmatprep.subr.bf16.mxu0 0
    %324 = vmatpush1.bf16.msra.mxu0 0
    %325 = vmatprep.subr.bf16.mxu0 0
    %326 = vmatpush1.bf16.msra.mxu0 0
    %327 = vmatprep.subr.bf16.mxu0 0
    %328 = vmatpush1.bf16.msra.mxu0 0
    %329 = vmatprep.subr.bf16.mxu0 0
    %330 = vmatpush1.bf16.msra.mxu0 0
    %331 = vmatprep.subr.bf16.mxu0 0
    %332 = vmatpush1.bf16.msra.mxu0 0
    %333 = vmatprep.subr.bf16.mxu0 0
    %334 = vmatpush1.bf16.msra.mxu0 0
    %335 = vmatprep.subr.bf16.mxu0 0
    %336 = vmatpush1.bf16.msra.mxu0 0
    %337 = vmatprep.subr.bf16.mxu0 0
    %338 = vmatpush1.bf16.msra.mxu0 0
    %339 = vmatprep.subr.bf16.mxu0 0
    %340 = vmatpush1.bf16.msra.mxu0 0
    %341 = vmatprep.subr.bf16.mxu0 0
    %342 = vmatpush1.bf16.msra.mxu0 0
    %343 = vmatprep.subr.bf16.mxu0 0
    %344 = vmatpush1.bf16.msra.mxu0 0
    %345 = vmatprep.subr.bf16.mxu0 0
    %346 = vmatpush1.bf16.msra.mxu0 0
    %347 = vmatprep.subr.bf16.mxu0 0
    %348 = vmatpush1.bf16.msra.mxu0 0
    %349 = vmatprep.subr.bf16.mxu0 0
    %350 = vmatpush1.bf16.msra.mxu0 0
    %351 = vmatprep.mubr.bf16.mxu0 0
    %352 = vmatmul.mubr.bf16.gmra.mrb[0].mxu0 %v317
    %v353 = vpop.f32.mrb[0].mxu0
    %v354 = vadd.f32 %v302, %v353
    %v355 = vpop.f32.mrb[0].mxu0
    %v356 = vpop.f32.mrb[0].mxu0
    %v357 = vpop.f32.mrb[0].mxu0
    %358 = vdwg.mxu0
    %359 = vst [vmem:[%s9] sm:$0xff] %v354
  $region45: #{bert_classifier_forward.1} parent=0 // pred_fallthru
    _
  // Predicated region
  $region46: #{bert_classifier_forward.1} parent=0 // pred_check
    _
  $region47: #{bert_classifier_forward.1} parent=0 // pred_check_branch
    %361 = sbr.rel (0) target = $region49
  $region48: #{bert_classifier_forward.1} parent=0 // pred_region
    _
  $region49: #{bert_classifier_forward.1} parent=0 // pred_fallthru
    _
  // Predicated region
  $region50: #{bert_classifier_forward.1} parent=0 // pred_check
    _
  $region51: #{bert_classifier_forward.1} parent=0 // pred_check_branch
    %363 = sbr.rel (0) target = $region53
  $region52: #{bert_classifier_forward.1} parent=0 // pred_region
    _
  $region53: #{bert_classifier_forward.1} parent=0 // pred_fallthru
    _

</llo_original>
